<compile_context>
chip_gen: v7x
topology: tpu7x:2x2x1
jax: 0.10.0
libtpu: 0.0.40
codegen_flags: <defaults>
</compile_context>

<pallas_src>
import jax
import jax.numpy as jnp
from jax.experimental import pallas as pl
from jax.experimental.pallas import tpu as pltpu

LANE = 128                      # lane width: feature/class padding target
NEG = -1e30                     # bias for padded class lanes -> exp() == 0
VMEM_LIMIT = 32 * 1024 * 1024   # keep 32 MiB (v7x physical VMEM is only 64 MiB)


def _round_up(x, m):
    return (x + m - 1) // m * m


def _pick_node_padding(n):
    """Pad node count to a 256-multiple; use 512 tiles when they divide evenly."""
    np_pad = _round_up(max(n, 256), 256)
    tile = 512 if np_pad % 512 == 0 else 256
    return np_pad, tile


def _dim_semantics(num_reduction_axes):
    """Row axis: CORE_PARALLEL on v7x (2 TCs), plain parallel elsewhere."""
    try:
        kind = jax.devices()[0].device_kind.lower()
    except Exception:  # pragma: no cover
        kind = ""
    if "v7" in kind:
        return ((pltpu.CORE_PARALLEL,)
                + (pltpu.ARBITRARY,) * num_reduction_axes)
    return ("parallel",) + ("arbitrary",) * num_reduction_axes


# ---------------- stage 1: h = relu(x @ W_in + b_in) -------------------------
def lin_relu_kernel(x_ref, w_ref, b_ref, h_ref):
    acc = jnp.dot(x_ref[...], w_ref[...], preferred_element_type=jnp.float32)
    h_ref[...] = jnp.maximum(acc + b_ref[...], 0.0).astype(h_ref.dtype)


# ---------------- stage 2: ah = A_hat @ h  (row tiles x column reduction) ----
def spmm_kernel(a_ref, h_ref, o_ref, acc_ref):
    @pl.when(pl.program_id(1) == 0)
    def _():
        acc_ref[...] = jnp.zeros_like(acc_ref)

    acc_ref[...] += jnp.dot(a_ref[...], h_ref[...],
                            preferred_element_type=jnp.float32)

    @pl.when(pl.program_id(1) == pl.num_programs(1) - 1)
    def _():
        o_ref[...] = acc_ref[...].astype(o_ref.dtype)


# ---- stage 3: a2h = A_hat @ ah, then fused MixHop + ReLU + lin2 + log_softmax
def mixhop_out_kernel(a_ref, ah_col_ref, h_row_ref, ah_row_ref,
                      w0_ref, w1_ref, w2_ref,
                      b0_ref, b1_ref, b2_ref,
                      wo0_ref, wo1_ref, wo2_ref, bo_ref,
                      o_ref, acc_ref, z_ref):
    k = pl.program_id(1)
    bf = jnp.bfloat16

    @pl.when(k == 0)
    def _():
        acc_ref[...] = jnp.zeros_like(acc_ref)
        # Spread the epilogue: powers 0 and 1 only need the resident row tiles
        # (h, A@h), so do them on the first reduction step.  z is accumulated
        # incrementally so only one ReLU activation is live at a time.
        # (dropout is identity in eval mode)
        x0 = jnp.maximum(
            jnp.dot(h_row_ref[...], w0_ref[...],
                    preferred_element_type=jnp.float32) + b0_ref[...], 0.0)
        z_ref[...] = bo_ref[...] + jnp.dot(      # padded class lanes carry -1e30
            x0.astype(bf), wo0_ref[...], preferred_element_type=jnp.float32)
        x1 = jnp.maximum(
            jnp.dot(ah_row_ref[...], w1_ref[...],
                    preferred_element_type=jnp.float32) + b1_ref[...], 0.0)
        z_ref[...] += jnp.dot(
            x1.astype(bf), wo1_ref[...], preferred_element_type=jnp.float32)

    # second hop: accumulate A_hat[i, k] @ (A_hat @ h)[k]
    acc_ref[...] += jnp.dot(a_ref[...], ah_col_ref[...],
                            preferred_element_type=jnp.float32)

    @pl.when(k == pl.num_programs(1) - 1)
    def _():
        a2h = acc_ref[...].astype(bf)
        x2 = jnp.maximum(
            jnp.dot(a2h, w2_ref[...],
                    preferred_element_type=jnp.float32) + b2_ref[...], 0.0)
        # lin2 over the implicit concat([x0, x1, x2]) == sum of per-power matmuls.
        z = z_ref[...] + jnp.dot(
            x2.astype(bf), wo2_ref[...], preferred_element_type=jnp.float32)
        # log_softmax over the (lane-dense, padded) class axis
        m = jnp.max(z, axis=1, keepdims=True)
        s = z - m
        lse = jnp.log(jnp.sum(jnp.exp(s), axis=1, keepdims=True))
        o_ref[...] = s - lse


def mixhop_forward(a_norm, x, w_in, b_in, w_mix, b_mix, w_out, b_out):
    """Mixhop_Net forward (eval mode) via three row-tiled Pallas TPU kernels."""
    N, F = x.shape
    H = w_in.shape[1]
    C = w_out.shape[1]

    NP, TILE = _pick_node_padding(N)      # node padding + row/col tile (256/512)
    FP = _round_up(F, LANE)
    HP = _round_up(H, LANE)
    CP = _round_up(C, LANE)

    bf, f32 = jnp.bfloat16, jnp.float32

    # ---- pad everything to lane-dense, (8,128)-aligned shapes; bf16 for MXU ----
    # Padded A columns are zero, so padded h rows (== relu(b_in)) never leak
    # into real output rows.
    ap = jnp.zeros((NP, NP), bf).at[:N, :N].set(a_norm.astype(bf))
    xp = jnp.zeros((NP, FP), bf).at[:N, :F].set(x.astype(bf))
    w_in_p = jnp.zeros((FP, HP), bf).at[:F, :H].set(w_in.astype(bf))
    b_in_p = jnp.zeros((1, HP), f32).at[0, :H].set(b_in)

    wps = [jnp.zeros((HP, HP), bf).at[:H, :H].set(w_mix[p].astype(bf))
           for p in range(3)]
    bps = [jnp.zeros((1, HP), f32).at[0, :H].set(b_mix[p * H:(p + 1) * H])
           for p in range(3)]
    wos = [jnp.zeros((HP, CP), bf).at[:H, :C].set(
               w_out[p * H:(p + 1) * H].astype(bf)) for p in range(3)]
    # Padded class lanes get a huge negative bias so they never win the max
    # nor contribute to the softmax sum.
    b_out_p = jnp.full((1, CP), NEG, f32).at[0, :C].set(b_out)

    R = NP // TILE
    K = NP // TILE

    params_1d = pltpu.CompilerParams(
        dimension_semantics=_dim_semantics(0), vmem_limit_bytes=VMEM_LIMIT)
    params_2d = pltpu.CompilerParams(
        dimension_semantics=_dim_semantics(1), vmem_limit_bytes=VMEM_LIMIT)

    # ---- stage 1: h = relu(x @ W_in + b_in) ----
    h = pl.pallas_call(
        lin_relu_kernel,
        out_shape=jax.ShapeDtypeStruct((NP, HP), bf),
        grid=(R,),
        in_specs=[
            pl.BlockSpec((TILE, FP), lambda i: (i, 0)),
            pl.BlockSpec((FP, HP), lambda i: (0, 0)),
            pl.BlockSpec((1, HP), lambda i: (0, 0)),
        ],
        out_specs=pl.BlockSpec((TILE, HP), lambda i: (i, 0)),
        compiler_params=params_1d,
    )(xp, w_in_p, b_in_p)

    # ---- stage 2: ah = A_hat @ h ----
    ah = pl.pallas_call(
        spmm_kernel,
        out_shape=jax.ShapeDtypeStruct((NP, HP), bf),
        grid=(R, K),
        in_specs=[
            pl.BlockSpec((TILE, TILE), lambda i, k: (i, k)),
            pl.BlockSpec((TILE, HP), lambda i, k: (k, 0)),
        ],
        out_specs=pl.BlockSpec((TILE, HP), lambda i, k: (i, 0)),
        scratch_shapes=[pltpu.VMEM((TILE, HP), jnp.float32)],
        compiler_params=params_2d,
    )(ap, h)

    # ---- stage 3: a2h = A_hat @ ah, fused MixHop/ReLU/lin2/log_softmax ----
    const2 = lambda i, k: (0, 0)
    out_p = pl.pallas_call(
        mixhop_out_kernel,
        out_shape=jax.ShapeDtypeStruct((NP, CP), f32),
        grid=(R, K),
        in_specs=[
            pl.BlockSpec((TILE, TILE), lambda i, k: (i, k)),   # A row x col
            pl.BlockSpec((TILE, HP), lambda i, k: (k, 0)),     # ah (reduction)
            pl.BlockSpec((TILE, HP), lambda i, k: (i, 0)),     # h  (row tile)
            pl.BlockSpec((TILE, HP), lambda i, k: (i, 0)),     # ah (row tile)
            pl.BlockSpec((HP, HP), const2),                    # W0
            pl.BlockSpec((HP, HP), const2),                    # W1
            pl.BlockSpec((HP, HP), const2),                    # W2
            pl.BlockSpec((1, HP), const2),                     # b_mix[0:H]
            pl.BlockSpec((1, HP), const2),                     # b_mix[H:2H]
            pl.BlockSpec((1, HP), const2),                     # b_mix[2H:3H]
            pl.BlockSpec((HP, CP), const2),                    # Wo0
            pl.BlockSpec((HP, CP), const2),                    # Wo1
            pl.BlockSpec((HP, CP), const2),                    # Wo2
            pl.BlockSpec((1, CP), const2),                     # b_out (+NEG pad)
        ],
        out_specs=pl.BlockSpec((TILE, CP), lambda i, k: (i, 0)),
        scratch_shapes=[pltpu.VMEM((TILE, HP), jnp.float32),   # A^2 h accumulator
                        pltpu.VMEM((TILE, CP), jnp.float32)],  # z accumulator
        compiler_params=params_2d,
    )(ap, ah, h, ah,
      wps[0], wps[1], wps[2], bps[0], bps[1], bps[2],
      wos[0], wos[1], wos[2], b_out_p)

    return out_p[:N, :C]


def glorot(key, shape):
    fan_in, fan_out = shape[-2], shape[-1]
    limit = jnp.sqrt(6.0 / (fan_in + fan_out))
    return jax.random.uniform(key, shape, jnp.float32, -limit, limit)


def reference_forward(a_norm, x, w_in, b_in, w_mix, b_mix, w_out, b_out):
    """Pure-JAX f32 reference of the same forward pass."""
    h = jax.nn.relu(x @ w_in + b_in)
    ah = a_norm @ h
    a2h = a_norm @ ah
    mix = jnp.concatenate([h @ w_mix[0], ah @ w_mix[1], a2h @ w_mix[2]],
                          axis=1) + b_mix
    mix = jax.nn.relu(mix)
    z = mix @ w_out + b_out
    return jax.nn.log_softmax(z, axis=1)


if __name__ == "__main__":
    # N nodes, F_in features, hidden width, num_classes (3*hidden feeds lin2).
    N, F_IN, HIDDEN, CLASSES = 256, 16, 32, 8

    key = jax.random.PRNGKey(0)
    kx, k_in, k0, k1, k2, k_out = jax.random.split(key, 6)

    # Node features.
    x = jax.random.normal(kx, (N, F_IN), jnp.float32)

    # Deterministic edge_index: ring graph, both directions.
    src = jnp.arange(N)
    dst = (src + 1) % N
    edge_index = jnp.stack([jnp.concatenate([src, dst]),
                            jnp.concatenate([dst, src])])  # (2, 2N)

    # Glue: dense GCN-normalized adjacency A_hat = D^{-1/2}(A+I)D^{-1/2}.
    A = jnp.zeros((N, N), jnp.float32).at[edge_index[0], edge_index[1]].set(1.0)
    A = A + jnp.eye(N, dtype=jnp.float32)
    deg = A.sum(axis=1)
    dinv = 1.0 / jnp.sqrt(deg)
    a_norm = dinv[:, None] * A * dinv[None, :]

    # Parameters (glorot weights, zero biases).
    w_in = glorot(k_in, (F_IN, HIDDEN))
    b_in = jnp.zeros((HIDDEN,), jnp.float32)
    w_mix = jnp.stack([glorot(k0, (HIDDEN, HIDDEN)),
                       glorot(k1, (HIDDEN, HIDDEN)),
                       glorot(k2, (HIDDEN, HIDDEN))])        # powers 0,1,2
    b_mix = jnp.zeros((3 * HIDDEN,), jnp.float32)
    w_out = glorot(k_out, (3 * HIDDEN, CLASSES))
    b_out = jnp.zeros((CLASSES,), jnp.float32)

    out = mixhop_forward(a_norm, x, w_in, b_in, w_mix, b_mix, w_out, b_out)
    out = jax.block_until_ready(out)

    # Sanity 1: rows of log_softmax exp-sum to 1.
    assert out.shape == (N, CLASSES)
    assert bool(jnp.allclose(jnp.exp(out).sum(axis=1), 1.0, atol=1e-4))

    # Sanity 2: matches an f32 reference on the same bf16-quantized operands.
    bf = jnp.bfloat16
    f32 = jnp.float32
    ref = reference_forward(a_norm.astype(bf).astype(f32),
                            x.astype(bf).astype(f32),
                            w_in.astype(bf).astype(f32), b_in,
                            w_mix.astype(bf).astype(f32), b_mix,
                            w_out.astype(bf).astype(f32), b_out)
    assert bool(jnp.allclose(jnp.exp(out), jnp.exp(ref), atol=5e-2))

    print("KERNEL_OK")
</pallas_src>

<mosaic_0001>
module attributes {stable_mosaic.version = 11 : i64} {
  func.func @lin_relu_kernel(%arg0: i32, %arg1: memref<256x128xbf16, #tpu.memory_space<vmem>>, %arg2: memref<128x128xbf16, #tpu.memory_space<vmem>>, %arg3: memref<1x128xf32, #tpu.memory_space<vmem>>, %arg4: memref<256x128xbf16, #tpu.memory_space<vmem>>) attributes {dimension_semantics = [#tpu.dimension_semantics<parallel>], iteration_bounds = array<i64: 1>, scalar_prefetch = 0 : i64, scratch_operands = 0 : i64, tpu.core_type = #tpu.core_type<tc>, window_params = [{transform_indices = @transform_0, window_bounds = array<i64: 256, 128>}, {pipeline_mode = #tpu.pipeline_mode<synchronous>, transform_indices = @transform_1, window_bounds = array<i64: 128, 128>}, {pipeline_mode = #tpu.pipeline_mode<synchronous>, transform_indices = @transform_2, window_bounds = array<i64: 1, 128>}, {transform_indices = @transform_3, window_bounds = array<i64: 256, 128>}]} {
    %c0 = arith.constant 0 : index
    %c0_0 = arith.constant 0 : index
    %0 = vector.load %arg1[%c0, %c0_0] : memref<256x128xbf16, #tpu.memory_space<vmem>>, vector<256x128xbf16>
    %c0_1 = arith.constant 0 : index
    %c0_2 = arith.constant 0 : index
    %1 = vector.load %arg2[%c0_1, %c0_2] : memref<128x128xbf16, #tpu.memory_space<vmem>>, vector<128x128xbf16>
    %cst = arith.constant dense<0.000000e+00> : vector<256x128xf32>
    %2 = tpu.matmul %0, %1, %cst {dimension_numbers = #tpu.dot_dimension_numbers<[1], [0], [0], [1], [0, 0, 1, 1], [], []>} : vector<256x128xbf16>, vector<128x128xbf16>, vector<256x128xf32> -> vector<256x128xf32>
    %c0_3 = arith.constant 0 : index
    %c0_4 = arith.constant 0 : index
    %3 = vector.load %arg3[%c0_3, %c0_4] : memref<1x128xf32, #tpu.memory_space<vmem>>, vector<1x128xf32>
    %4 = vector.broadcast %3 : vector<1x128xf32> to vector<256x128xf32>
    %5 = arith.addf %2, %4 : vector<256x128xf32>
    %cst_5 = arith.constant 0.000000e+00 : f32
    %6 = vector.broadcast %cst_5 : f32 to vector<256x128xf32>
    %7 = arith.maximumf %5, %6 : vector<256x128xf32>
    %8 = arith.truncf %7 : vector<256x128xf32> to vector<256x128xbf16>
    %c0_6 = arith.constant 0 : index
    %c0_7 = arith.constant 0 : index
    %9 = vector.load %arg4[%c0_6, %c0_7] : memref<256x128xbf16, #tpu.memory_space<vmem>>, vector<256x128xbf16>
    tpu.vector_store %arg4[%c0_6, %c0_7], %8 {strides = array<i32>} : memref<256x128xbf16, #tpu.memory_space<vmem>>, vector<256x128xbf16>,
    return
  }
  func.func @transform_0(%arg0: i32) -> (i32, i32) {
    %c0_i32 = arith.constant 0 : i32
    %c0_i32_0 = arith.constant 0 : i32
    return %arg0, %c0_i32 : i32, i32
  }
  func.func @transform_1(%arg0: i32) -> (i32, i32) {
    %c0_i32 = arith.constant 0 : i32
    %c0_i32_0 = arith.constant 0 : i32
    %c0_i32_1 = arith.constant 0 : i32
    return %c0_i32, %c0_i32_0 : i32, i32
  }
  func.func @transform_2(%arg0: i32) -> (i32, i32) {
    %c0_i32 = arith.constant 0 : i32
    %c0_i32_0 = arith.constant 0 : i32
    %c0_i32_1 = arith.constant 0 : i32
    return %c0_i32, %c0_i32_0 : i32, i32
  }
  func.func @transform_3(%arg0: i32) -> (i32, i32) {
    %c0_i32 = arith.constant 0 : i32
    %c0_i32_0 = arith.constant 0 : i32
    return %arg0, %c0_i32 : i32, i32
  }
}

</mosaic_0001>

<llo_original>
// kernel: tpu_custom_call.1
$region0: #{tpu_custom_call.1}
  #allocation0 [shape = 'u32[]', space=smem, size = 0x4, offset = 0x4, fixed_abs, tag = 'smem constant byte address 0x4 - core index']
  #allocation1 [shape = 'u32[144,128]{1,0:T(1,128)}', space=vmem, size = 0x12000, scoped, tag = 'internal scratch']
  %s0 = inlined_call_operand.hbm [shape: bf16[256,128], index: 0, kind: input, shape index: {}]
  %s1 = inlined_call_operand.hbm [shape: bf16[128,128], index: 1, kind: input, shape index: {}]
  %s2 = inlined_call_operand.vmem [shape: f32[1,128], index: 2, kind: input, shape index: {}]
  %s3 = inlined_call_operand.hbm [shape: bf16[256,128], index: 3, kind: output, shape index: {}]
  %s4 = sld [smem:[#allocation0]]
  $region30: #{tpu_custom_call.1} parent=0
    _
  %s6 = ssub.s32 1, %s4
  %s7 = scalar_select 0, %s6, %s4
  $region1: #{tpu_custom_call.1} parent=0
    #allocation2 [shape = 'u8[65536]{0}', space=vmem, size = 0x10000, scoped, tag = 'input window, operand 0, single buffered']
    #allocation3 [shape = 's32[1]{0}', space=sflag, size = 0x4, scoped, tag = 'scoped memory for tpu_custom_call.1']
    #allocation4 [shape = 's32[1]{0}', space=sflag, size = 0x4, scoped, tag = 'scoped memory for tpu_custom_call.1']
    #allocation5 [shape = 'u8[32768]{0}', space=vmem, size = 0x8000, scoped, tag = 'input window, operand 1, single buffered']
    #allocation6 [shape = 's32[1]{0}', space=sflag, size = 0x4, scoped, tag = 'scoped memory for tpu_custom_call.1']
    #allocation7 [shape = 'u8[65536]{0}', space=vmem, size = 0x10000, scoped, tag = 'output window, operand 0, single buffered']
    %8 = vsyncpa [#allocation3], 0
    %9 = vsyncpa [#allocation6], 0
    %10 = vsyncpa [#allocation4], 0
    // Predicated region
    $region2: #{tpu_custom_call.1} parent=1 // pred_check
      _
    $region3: #{tpu_custom_call.1} parent=1 // pred_check_branch
      %12 = sbr.rel (0) target = $region5
    $region4: #{tpu_custom_call.1} parent=1 // pred_region
      %s14 = ssub.s32 2048, 2048
      %15 = vsyncadd [#allocation3], %s14
      %s16 = sshll.u32 [#allocation2], 4
      %s17 = int_to_ptr.vmem [resolvable:$true] %s16
      %22 = dma.hbm_to_vmem [thread:$0]  %s0, 2048, %s17, [#allocation3], 64, 64, 4
    $region5: #{tpu_custom_call.1} parent=1 // pred_fallthru
      _
    // Predicated region
    $region6: #{tpu_custom_call.1} parent=1 // pred_check
      _
    $region7: #{tpu_custom_call.1} parent=1 // pred_check_branch
      %24 = sbr.rel (0) target = $region9
    $region8: #{tpu_custom_call.1} parent=1 // pred_region
      %s26 = ssub.s32 1024, 1024
      %27 = vsyncadd [#allocation6], %s26
      %s28 = sshll.u32 [#allocation5], 4
      %s29 = int_to_ptr.vmem [resolvable:$true] %s28
      %34 = dma.hbm_to_vmem [thread:$0]  %s1, 1024, %s29, [#allocation6], 64, 64, 4
    $region9: #{tpu_custom_call.1} parent=1 // pred_fallthru
      _
    // Predicated region
    $region10: #{tpu_custom_call.1} parent=1 // pred_check
      _
    $region11: #{tpu_custom_call.1} parent=1 // pred_check_branch
      %36 = sbr.rel (0) target = $region13
    $region12: #{tpu_custom_call.1} parent=1 // pred_region
      _
    $region13: #{tpu_custom_call.1} parent=1 // pred_fallthru
      _
    // Predicated region
    $region14: #{tpu_custom_call.1} parent=1 // pred_check
      _
    $region15: #{tpu_custom_call.1} parent=1 // pred_check_branch
      %38 = sbr.rel (0) target = $region17
    $region16: #{tpu_custom_call.1} parent=1 // pred_region
      %39 = dma.done [#allocation3], 2048
    $region17: #{tpu_custom_call.1} parent=1 // pred_fallthru
      _
    // Predicated region
    $region18: #{tpu_custom_call.1} parent=1 // pred_check
      _
    $region19: #{tpu_custom_call.1} parent=1 // pred_check_branch
      %41 = sbr.rel (0) target = $region21
    $region20: #{tpu_custom_call.1} parent=1 // pred_region
      %42 = dma.done [#allocation6], 1024
    $region21: #{tpu_custom_call.1} parent=1 // pred_fallthru
      _
    %v44 = vld [vmem:[#allocation2] sm:$0xf]
    %v45 = vld [vmem:[#allocation2 + $0x4] sm:$0xf]
    %v46 = vld [vmem:[#allocation2 + $0x8] sm:$0xf]
    %v47 = vld [vmem:[#allocation2 + $0xc] sm:$0xf]
    %v48 = vld [vmem:[#allocation2 + $0x10] sm:$0xf]
    %v49 = vld [vmem:[#allocation2 + $0x14] sm:$0xf]
    %v50 = vld [vmem:[#allocation2 + $0x18] sm:$0xf]
    %v51 = vld [vmem:[#allocation2 + $0x1c] sm:$0xf]
    %v52 = vld [vmem:[#allocation2 + $0x20] sm:$0xf]
    %v53 = vld [vmem:[#allocation2 + $0x24] sm:$0xf]
    %v54 = vld [vmem:[#allocation2 + $0x28] sm:$0xf]
    %v55 = vld [vmem:[#allocation2 + $0x2c] sm:$0xf]
    %v56 = vld [vmem:[#allocation2 + $0x30] sm:$0xf]
    %v57 = vld [vmem:[#allocation2 + $0x34] sm:$0xf]
    %v58 = vld [vmem:[#allocation2 + $0x38] sm:$0xf]
    %v59 = vld [vmem:[#allocation2 + $0x3c] sm:$0xf]
    %v60 = vld [vmem:[#allocation2 + $0x40] sm:$0xf]
    %v61 = vld [vmem:[#allocation2 + $0x44] sm:$0xf]
    %v62 = vld [vmem:[#allocation2 + $0x48] sm:$0xf]
    %v63 = vld [vmem:[#allocation2 + $0x4c] sm:$0xf]
    %v64 = vld [vmem:[#allocation2 + $0x50] sm:$0xf]
    %v65 = vld [vmem:[#allocation2 + $0x54] sm:$0xf]
    %v66 = vld [vmem:[#allocation2 + $0x58] sm:$0xf]
    %v67 = vld [vmem:[#allocation2 + $0x5c] sm:$0xf]
    %v68 = vld [vmem:[#allocation2 + $0x60] sm:$0xf]
    %v69 = vld [vmem:[#allocation2 + $0x64] sm:$0xf]
    %v70 = vld [vmem:[#allocation2 + $0x68] sm:$0xf]
    %v71 = vld [vmem:[#allocation2 + $0x6c] sm:$0xf]
    %v72 = vld [vmem:[#allocation2 + $0x70] sm:$0xf]
    %v73 = vld [vmem:[#allocation2 + $0x74] sm:$0xf]
    %v74 = vld [vmem:[#allocation2 + $0x78] sm:$0xf]
    %v75 = vld [vmem:[#allocation2 + $0x7c] sm:$0xf]
    %v76 = vld [vmem:[#allocation5] sm:$0xf]
    %v77 = vld [vmem:[#allocation5 + $0x4] sm:$0xf]
    %v78 = vld [vmem:[#allocation5 + $0x8] sm:$0xf]
    %v79 = vld [vmem:[#allocation5 + $0xc] sm:$0xf]
    %v80 = vld [vmem:[#allocation5 + $0x10] sm:$0xf]
    %v81 = vld [vmem:[#allocation5 + $0x14] sm:$0xf]
    %v82 = vld [vmem:[#allocation5 + $0x18] sm:$0xf]
    %v83 = vld [vmem:[#allocation5 + $0x1c] sm:$0xf]
    %v84 = vld [vmem:[#allocation5 + $0x20] sm:$0xf]
    %v85 = vld [vmem:[#allocation5 + $0x24] sm:$0xf]
    %v86 = vld [vmem:[#allocation5 + $0x28] sm:$0xf]
    %v87 = vld [vmem:[#allocation5 + $0x2c] sm:$0xf]
    %v88 = vld [vmem:[#allocation5 + $0x30] sm:$0xf]
    %v89 = vld [vmem:[#allocation5 + $0x34] sm:$0xf]
    %v90 = vld [vmem:[#allocation5 + $0x38] sm:$0xf]
    %v91 = vld [vmem:[#allocation5 + $0x3c] sm:$0xf]
    %v92 = vld [vmem:[%s2] sm:$0x1]
    %v94 = vlaneseq
    %v95 = vshrl.u32 %v94, 7
    %v96 = vsub.s32 0, %v95
    %v97 = vrot.slane %v92, %v96
    %v131 = vunpack.c.l.b16 %v44
    %v132 = vunpack.c.l.b16 %v45
    %v133 = vunpack.c.l.b16 %v46
    %v134 = vunpack.c.l.b16 %v47
    %v135 = vunpack.c.l.b16 %v48
    %v136 = vunpack.c.l.b16 %v49
    %v137 = vunpack.c.l.b16 %v50
    %v138 = vunpack.c.l.b16 %v51
    %v139 = vunpack.c.l.b16 %v52
    %v140 = vunpack.c.l.b16 %v53
    %v141 = vunpack.c.l.b16 %v54
    %v142 = vunpack.c.l.b16 %v55
    %v143 = vunpack.c.l.b16 %v56
    %v144 = vunpack.c.l.b16 %v57
    %v145 = vunpack.c.l.b16 %v58
    %v146 = vunpack.c.l.b16 %v59
    %v147 = vunpack.c.l.b16 %v60
    %v148 = vunpack.c.l.b16 %v61
    %v149 = vunpack.c.l.b16 %v62
    %v150 = vunpack.c.l.b16 %v63
    %v151 = vunpack.c.l.b16 %v64
    %v152 = vunpack.c.l.b16 %v65
    %v153 = vunpack.c.l.b16 %v66
    %v154 = vunpack.c.l.b16 %v67
    %v155 = vunpack.c.l.b16 %v68
    %v156 = vunpack.c.l.b16 %v69
    %v157 = vunpack.c.l.b16 %v70
    %v158 = vunpack.c.l.b16 %v71
    %v159 = vunpack.c.l.b16 %v72
    %v160 = vunpack.c.l.b16 %v73
    %v161 = vunpack.c.l.b16 %v74
    %v162 = vunpack.c.l.b16 %v75
    %v163 = vpack.c.b16 %v132, %v131
    %v164 = vpack.c.b16 %v134, %v133
    %v165 = vpack.c.b16 %v136, %v135
    %v166 = vpack.c.b16 %v138, %v137
    %v167 = vpack.c.b16 %v140, %v139
    %v168 = vpack.c.b16 %v142, %v141
    %v169 = vpack.c.b16 %v144, %v143
    %v170 = vpack.c.b16 %v146, %v145
    %v171 = vpack.c.b16 %v148, %v147
    %v172 = vpack.c.b16 %v150, %v149
    %v173 = vpack.c.b16 %v152, %v151
    %v174 = vpack.c.b16 %v154, %v153
    %v175 = vpack.c.b16 %v156, %v155
    %v176 = vpack.c.b16 %v158, %v157
    %v177 = vpack.c.b16 %v160, %v159
    %v178 = vpack.c.b16 %v162, %v161
    %v211 = vunpack.c.l.b16 %v76
    %v212 = vunpack.c.l.b16 %v77
    %v213 = vunpack.c.l.b16 %v78
    %v214 = vunpack.c.l.b16 %v79
    %v215 = vunpack.c.l.b16 %v80
    %v216 = vunpack.c.l.b16 %v81
    %v217 = vunpack.c.l.b16 %v82
    %v218 = vunpack.c.l.b16 %v83
    %v219 = vunpack.c.l.b16 %v84
    %v220 = vunpack.c.l.b16 %v85
    %v221 = vunpack.c.l.b16 %v86
    %v222 = vunpack.c.l.b16 %v87
    %v223 = vunpack.c.l.b16 %v88
    %v224 = vunpack.c.l.b16 %v89
    %v225 = vunpack.c.l.b16 %v90
    %v226 = vunpack.c.l.b16 %v91
    %v227 = vpack.c.b16 %v212, %v211
    %v228 = vpack.c.b16 %v214, %v213
    %v229 = vpack.c.b16 %v216, %v215
    %v230 = vpack.c.b16 %v218, %v217
    %v231 = vpack.c.b16 %v220, %v219
    %v232 = vpack.c.b16 %v222, %v221
    %v233 = vpack.c.b16 %v224, %v223
    %v234 = vpack.c.b16 %v226, %v225
    %243 = vmatprep.subr.bf16.mxu0 0
    %244 = vmatpush1.bf16.msra.mxu0 %v227
    %245 = vmatprep.subr.bf16.mxu0 0
    %246 = vmatpush1.bf16.msra.mxu0 %v228
    %247 = vmatprep.subr.bf16.mxu0 0
    %248 = vmatpush1.bf16.msra.mxu0 %v229
    %249 = vmatprep.subr.bf16.mxu0 0
    %250 = vmatpush1.bf16.msra.mxu0 %v230
    %251 = vmatprep.subr.bf16.mxu0 0
    %252 = vmatpush1.bf16.msra.mxu0 %v231
    %253 = vmatprep.subr.bf16.mxu0 0
    %254 = vmatpush1.bf16.msra.mxu0 %v232
    %255 = vmatprep.subr.bf16.mxu0 0
    %256 = vmatpush1.bf16.msra.mxu0 %v233
    %257 = vmatprep.subr.bf16.mxu0 0
    %258 = vmatpush1.bf16.msra.mxu0 %v234
    %259 = vmatprep.subr.bf16.mxu0 0
    %260 = vmatpush1.bf16.msra.mxu0 0
    %261 = vmatprep.subr.bf16.mxu0 0
    %262 = vmatpush1.bf16.msra.mxu0 0
    %263 = vmatprep.subr.bf16.mxu0 0
    %264 = vmatpush1.bf16.msra.mxu0 0
    %265 = vmatprep.subr.bf16.mxu0 0
    %266 = vmatpush1.bf16.msra.mxu0 0
    %267 = vmatprep.subr.bf16.mxu0 0
    %268 = vmatpush1.bf16.msra.mxu0 0
    %269 = vmatprep.subr.bf16.mxu0 0
    %270 = vmatpush1.bf16.msra.mxu0 0
    %271 = vmatprep.subr.bf16.mxu0 0
    %272 = vmatpush1.bf16.msra.mxu0 0
    %273 = vmatprep.subr.bf16.mxu0 0
    %274 = vmatpush1.bf16.msra.mxu0 0
    %275 = vmatprep.mubr.bf16.mxu0 0
    %276 = vmatmul.mubr.bf16.gmra.mrb[0].mxu0 %v163
    %v277 = vpop.f32.mrb[0].mxu0
    %v278 = vadd.f32 %v97, %v277
    %v279 = vpop.f32.mrb[0].mxu0
    %v280 = vpop.f32.mrb[0].mxu0
    %v281 = vadd.f32 %v97, %v280
    %v282 = vpop.f32.mrb[0].mxu0
    %283 = vmatprep.mubr.bf16.mxu0 0
    %284 = vmatmul.mubr.bf16.gmra.mrb[0].mxu0 %v164
    %v285 = vpop.f32.mrb[0].mxu0
    %v286 = vadd.f32 %v97, %v285
    %v287 = vpop.f32.mrb[0].mxu0
    %v288 = vpop.f32.mrb[0].mxu0
    %v289 = vadd.f32 %v97, %v288
    %v290 = vpop.f32.mrb[0].mxu0
    %291 = vmatprep.mubr.bf16.mxu0 0
    %292 = vmatmul.mubr.bf16.gmra.mrb[0].mxu0 %v165
    %v293 = vpop.f32.mrb[0].mxu0
    %v294 = vadd.f32 %v97, %v293
    %v295 = vpop.f32.mrb[0].mxu0
    %v296 = vpop.f32.mrb[0].mxu0
    %v297 = vadd.f32 %v97, %v296
    %v298 = vpop.f32.mrb[0].mxu0
    %299 = vmatprep.mubr.bf16.mxu0 0
    %300 = vmatmul.mubr.bf16.gmra.mrb[0].mxu0 %v166
    %v301 = vpop.f32.mrb[0].mxu0
    %v302 = vadd.f32 %v97, %v301
    %v303 = vpop.f32.mrb[0].mxu0
    %v304 = vpop.f32.mrb[0].mxu0
    %v305 = vadd.f32 %v97, %v304
    %v306 = vpop.f32.mrb[0].mxu0
    %307 = vmatprep.mubr.bf16.mxu0 0
    %308 = vmatmul.mubr.bf16.gmra.mrb[0].mxu0 %v167
    %v309 = vpop.f32.mrb[0].mxu0
    %v310 = vadd.f32 %v97, %v309
    %v311 = vpop.f32.mrb[0].mxu0
    %v312 = vpop.f32.mrb[0].mxu0
    %v313 = vadd.f32 %v97, %v312
    %v314 = vpop.f32.mrb[0].mxu0
    %315 = vmatprep.mubr.bf16.mxu0 0
    %316 = vmatmul.mubr.bf16.gmra.mrb[0].mxu0 %v168
    %v317 = vpop.f32.mrb[0].mxu0
    %v318 = vadd.f32 %v97, %v317
    %v319 = vpop.f32.mrb[0].mxu0
    %v320 = vpop.f32.mrb[0].mxu0
    %v321 = vadd.f32 %v97, %v320
    %v322 = vpop.f32.mrb[0].mxu0
    %323 = vmatprep.mubr.bf16.mxu0 0
    %324 = vmatmul.mubr.bf16.gmra.mrb[0].mxu0 %v169
    %v325 = vpop.f32.mrb[0].mxu0
    %v326 = vadd.f32 %v97, %v325
    %v327 = vpop.f32.mrb[0].mxu0
    %v328 = vpop.f32.mrb[0].mxu0
    %v329 = vadd.f32 %v97, %v328
    %v330 = vpop.f32.mrb[0].mxu0
    %331 = vmatprep.mubr.bf16.mxu0 0
    %332 = vmatmul.mubr.bf16.gmra.mrb[0].mxu0 %v170
    %v333 = vpop.f32.mrb[0].mxu0
    %v334 = vadd.f32 %v97, %v333
    %v335 = vpop.f32.mrb[0].mxu0
    %v336 = vpop.f32.mrb[0].mxu0
    %v337 = vadd.f32 %v97, %v336
    %v338 = vpop.f32.mrb[0].mxu0
    %339 = vmatprep.mubr.bf16.mxu0 0
    %340 = vmatmul.mubr.bf16.gmra.mrb[0].mxu0 %v171
    %v341 = vpop.f32.mrb[0].mxu0
    %v342 = vadd.f32 %v97, %v341
    %v343 = vpop.f32.mrb[0].mxu0
    %v344 = vpop.f32.mrb[0].mxu0
    %v345 = vadd.f32 %v97, %v344
    %v346 = vpop.f32.mrb[0].mxu0
    %347 = vmatprep.mubr.bf16.mxu0 0
    %348 = vmatmul.mubr.bf16.gmra.mrb[0].mxu0 %v172
    %v349 = vpop.f32.mrb[0].mxu0
    %v350 = vadd.f32 %v97, %v349
    %v351 = vpop.f32.mrb[0].mxu0
    %v352 = vpop.f32.mrb[0].mxu0
    %v353 = vadd.f32 %v97, %v352
    %v354 = vpop.f32.mrb[0].mxu0
    %355 = vmatprep.mubr.bf16.mxu0 0
    %356 = vmatmul.mubr.bf16.gmra.mrb[0].mxu0 %v173
    %v357 = vpop.f32.mrb[0].mxu0
    %v358 = vadd.f32 %v97, %v357
    %v359 = vpop.f32.mrb[0].mxu0
    %v360 = vpop.f32.mrb[0].mxu0
    %v361 = vadd.f32 %v97, %v360
    %v362 = vpop.f32.mrb[0].mxu0
    %363 = vmatprep.mubr.bf16.mxu0 0
    %364 = vmatmul.mubr.bf16.gmra.mrb[0].mxu0 %v174
    %v365 = vpop.f32.mrb[0].mxu0
    %v366 = vadd.f32 %v97, %v365
    %v367 = vpop.f32.mrb[0].mxu0
    %v368 = vpop.f32.mrb[0].mxu0
    %v369 = vadd.f32 %v97, %v368
    %v370 = vpop.f32.mrb[0].mxu0
    %371 = vmatprep.mubr.bf16.mxu0 0
    %372 = vmatmul.mubr.bf16.gmra.mrb[0].mxu0 %v175
    %v373 = vpop.f32.mrb[0].mxu0
    %v374 = vadd.f32 %v97, %v373
    %v375 = vpop.f32.mrb[0].mxu0
    %v376 = vpop.f32.mrb[0].mxu0
    %v377 = vadd.f32 %v97, %v376
    %v378 = vpop.f32.mrb[0].mxu0
    %379 = vmatprep.mubr.bf16.mxu0 0
    %380 = vmatmul.mubr.bf16.gmra.mrb[0].mxu0 %v176
    %v381 = vpop.f32.mrb[0].mxu0
    %v382 = vadd.f32 %v97, %v381
    %v383 = vpop.f32.mrb[0].mxu0
    %v384 = vpop.f32.mrb[0].mxu0
    %v385 = vadd.f32 %v97, %v384
    %v386 = vpop.f32.mrb[0].mxu0
    %387 = vmatprep.mubr.bf16.mxu0 0
    %388 = vmatmul.mubr.bf16.gmra.mrb[0].mxu0 %v177
    %v389 = vpop.f32.mrb[0].mxu0
    %v390 = vadd.f32 %v97, %v389
    %v391 = vpop.f32.mrb[0].mxu0
    %v392 = vpop.f32.mrb[0].mxu0
    %v393 = vadd.f32 %v97, %v392
    %v394 = vpop.f32.mrb[0].mxu0
    %395 = vmatprep.mubr.bf16.mxu0 0
    %396 = vmatmul.mubr.bf16.gmra.mrb[0].mxu0 %v178
    %v397 = vpop.f32.mrb[0].mxu0
    %v398 = vadd.f32 %v97, %v397
    %v399 = vpop.f32.mrb[0].mxu0
    %v400 = vpop.f32.mrb[0].mxu0
    %v401 = vadd.f32 %v97, %v400
    %v402 = vpop.f32.mrb[0].mxu0
    %403 = vdwg.mxu0
    %v404 = vmax.f32 %v278, 0.0
    %v405 = vmax.f32 %v281, 0.0
    %v406 = vmax.f32 %v286, 0.0
    %v407 = vmax.f32 %v289, 0.0
    %v408 = vmax.f32 %v294, 0.0
    %v409 = vmax.f32 %v297, 0.0
    %v410 = vmax.f32 %v302, 0.0
    %v411 = vmax.f32 %v305, 0.0
    %v412 = vmax.f32 %v310, 0.0
    %v413 = vmax.f32 %v313, 0.0
    %v414 = vmax.f32 %v318, 0.0
    %v415 = vmax.f32 %v321, 0.0
    %v416 = vmax.f32 %v326, 0.0
    %v417 = vmax.f32 %v329, 0.0
    %v418 = vmax.f32 %v334, 0.0
    %v419 = vmax.f32 %v337, 0.0
    %v420 = vmax.f32 %v342, 0.0
    %v421 = vmax.f32 %v345, 0.0
    %v422 = vmax.f32 %v350, 0.0
    %v423 = vmax.f32 %v353, 0.0
    %v424 = vmax.f32 %v358, 0.0
    %v425 = vmax.f32 %v361, 0.0
    %v426 = vmax.f32 %v366, 0.0
    %v427 = vmax.f32 %v369, 0.0
    %v428 = vmax.f32 %v374, 0.0
    %v429 = vmax.f32 %v377, 0.0
    %v430 = vmax.f32 %v382, 0.0
    %v431 = vmax.f32 %v385, 0.0
    %v432 = vmax.f32 %v390, 0.0
    %v433 = vmax.f32 %v393, 0.0
    %v434 = vmax.f32 %v398, 0.0
    %v435 = vmax.f32 %v401, 0.0
    %v436 = vpack.c.bf16 %v405, %v404
    %v437 = vpack.c.bf16 %v407, %v406
    %v438 = vpack.c.bf16 %v409, %v408
    %v439 = vpack.c.bf16 %v411, %v410
    %v440 = vpack.c.bf16 %v413, %v412
    %v441 = vpack.c.bf16 %v415, %v414
    %v442 = vpack.c.bf16 %v417, %v416
    %v443 = vpack.c.bf16 %v419, %v418
    %v444 = vpack.c.bf16 %v421, %v420
    %v445 = vpack.c.bf16 %v423, %v422
    %v446 = vpack.c.bf16 %v425, %v424
    %v447 = vpack.c.bf16 %v427, %v426
    %v448 = vpack.c.bf16 %v429, %v428
    %v449 = vpack.c.bf16 %v431, %v430
    %v450 = vpack.c.bf16 %v433, %v432
    %v451 = vpack.c.bf16 %v435, %v434
    %v468 = vunpack.c.l.b16 %v436
    %v469 = vunpack.c.h.b16 %v436
    %v470 = vunpack.c.l.b16 %v437
    %v471 = vunpack.c.h.b16 %v437
    %v472 = vunpack.c.l.b16 %v438
    %v473 = vunpack.c.h.b16 %v438
    %v474 = vunpack.c.l.b16 %v439
    %v475 = vunpack.c.h.b16 %v439
    %v476 = vunpack.c.l.b16 %v440
    %v477 = vunpack.c.h.b16 %v440
    %v478 = vunpack.c.l.b16 %v441
    %v479 = vunpack.c.h.b16 %v441
    %v480 = vunpack.c.l.b16 %v442
    %v481 = vunpack.c.h.b16 %v442
    %v482 = vunpack.c.l.b16 %v443
    %v483 = vunpack.c.h.b16 %v443
    %v484 = vunpack.c.l.b16 %v444
    %v485 = vunpack.c.h.b16 %v444
    %v486 = vunpack.c.l.b16 %v445
    %v487 = vunpack.c.h.b16 %v445
    %v488 = vunpack.c.l.b16 %v446
    %v489 = vunpack.c.h.b16 %v446
    %v490 = vunpack.c.l.b16 %v447
    %v491 = vunpack.c.h.b16 %v447
    %v492 = vunpack.c.l.b16 %v448
    %v493 = vunpack.c.h.b16 %v448
    %v494 = vunpack.c.l.b16 %v449
    %v495 = vunpack.c.h.b16 %v449
    %v496 = vunpack.c.l.b16 %v450
    %v497 = vunpack.c.h.b16 %v450
    %v498 = vunpack.c.l.b16 %v451
    %v499 = vunpack.c.h.b16 %v451
    %v500 = vpack.c.b16 %v468, %v468
    %v501 = vpack.c.b16 %v469, %v469
    %v502 = vpack.c.b16 %v470, %v470
    %v503 = vpack.c.b16 %v471, %v471
    %v504 = vpack.c.b16 %v472, %v472
    %v505 = vpack.c.b16 %v473, %v473
    %v506 = vpack.c.b16 %v474, %v474
    %v507 = vpack.c.b16 %v475, %v475
    %v508 = vpack.c.b16 %v476, %v476
    %v509 = vpack.c.b16 %v477, %v477
    %v510 = vpack.c.b16 %v478, %v478
    %v511 = vpack.c.b16 %v479, %v479
    %v512 = vpack.c.b16 %v480, %v480
    %v513 = vpack.c.b16 %v481, %v481
    %v514 = vpack.c.b16 %v482, %v482
    %v515 = vpack.c.b16 %v483, %v483
    %v516 = vpack.c.b16 %v484, %v484
    %v517 = vpack.c.b16 %v485, %v485
    %v518 = vpack.c.b16 %v486, %v486
    %v519 = vpack.c.b16 %v487, %v487
    %v520 = vpack.c.b16 %v488, %v488
    %v521 = vpack.c.b16 %v489, %v489
    %v522 = vpack.c.b16 %v490, %v490
    %v523 = vpack.c.b16 %v491, %v491
    %v524 = vpack.c.b16 %v492, %v492
    %v525 = vpack.c.b16 %v493, %v493
    %v526 = vpack.c.b16 %v494, %v494
    %v527 = vpack.c.b16 %v495, %v495
    %v528 = vpack.c.b16 %v496, %v496
    %v529 = vpack.c.b16 %v497, %v497
    %v530 = vpack.c.b16 %v498, %v498
    %v531 = vpack.c.b16 %v499, %v499
    %564 = vst [vmem:[#allocation7] sm:$0xf] %v500
    %565 = vst [vmem:[#allocation7 + $0x4] sm:$0xf] %v501
    %566 = vst [vmem:[#allocation7 + $0x8] sm:$0xf] %v502
    %567 = vst [vmem:[#allocation7 + $0xc] sm:$0xf] %v503
    %568 = vst [vmem:[#allocation7 + $0x10] sm:$0xf] %v504
    %569 = vst [vmem:[#allocation7 + $0x14] sm:$0xf] %v505
    %570 = vst [vmem:[#allocation7 + $0x18] sm:$0xf] %v506
    %571 = vst [vmem:[#allocation7 + $0x1c] sm:$0xf] %v507
    %572 = vst [vmem:[#allocation7 + $0x20] sm:$0xf] %v508
    %573 = vst [vmem:[#allocation7 + $0x24] sm:$0xf] %v509
    %574 = vst [vmem:[#allocation7 + $0x28] sm:$0xf] %v510
    %575 = vst [vmem:[#allocation7 + $0x2c] sm:$0xf] %v511
    %576 = vst [vmem:[#allocation7 + $0x30] sm:$0xf] %v512
    %577 = vst [vmem:[#allocation7 + $0x34] sm:$0xf] %v513
    %578 = vst [vmem:[#allocation7 + $0x38] sm:$0xf] %v514
    %579 = vst [vmem:[#allocation7 + $0x3c] sm:$0xf] %v515
    %580 = vst [vmem:[#allocation7 + $0x40] sm:$0xf] %v516
    %581 = vst [vmem:[#allocation7 + $0x44] sm:$0xf] %v517
    %582 = vst [vmem:[#allocation7 + $0x48] sm:$0xf] %v518
    %583 = vst [vmem:[#allocation7 + $0x4c] sm:$0xf] %v519
    %584 = vst [vmem:[#allocation7 + $0x50] sm:$0xf] %v520
    %585 = vst [vmem:[#allocation7 + $0x54] sm:$0xf] %v521
    %586 = vst [vmem:[#allocation7 + $0x58] sm:$0xf] %v522
    %587 = vst [vmem:[#allocation7 + $0x5c] sm:$0xf] %v523
    %588 = vst [vmem:[#allocation7 + $0x60] sm:$0xf] %v524
    %589 = vst [vmem:[#allocation7 + $0x64] sm:$0xf] %v525
    %590 = vst [vmem:[#allocation7 + $0x68] sm:$0xf] %v526
    %591 = vst [vmem:[#allocation7 + $0x6c] sm:$0xf] %v527
    %592 = vst [vmem:[#allocation7 + $0x70] sm:$0xf] %v528
    %593 = vst [vmem:[#allocation7 + $0x74] sm:$0xf] %v529
    %594 = vst [vmem:[#allocation7 + $0x78] sm:$0xf] %v530
    %595 = vst [vmem:[#allocation7 + $0x7c] sm:$0xf] %v531
    // Predicated region
    $region22: #{tpu_custom_call.1} parent=1 // pred_check
      _
    $region23: #{tpu_custom_call.1} parent=1 // pred_check_branch
      %597 = sbr.rel (0) target = $region25
    $region24: #{tpu_custom_call.1} parent=1 // pred_region
      %s599 = ssub.s32 2048, 2048
      %600 = vsyncadd [#allocation4], %s599
      %s601 = sshll.u32 [#allocation7], 4
      %s602 = int_to_ptr.vmem [resolvable:$true] %s601
      %607 = dma.vmem_to_hbm [thread:$0]  %s602, 2048, %s3, [#allocation4], 64, 64, 4
    $region25: #{tpu_custom_call.1} parent=1 // pred_fallthru
      _
    // Predicated region
    $region26: #{tpu_custom_call.1} parent=1 // pred_check
      _
    $region27: #{tpu_custom_call.1} parent=1 // pred_check_branch
      %609 = sbr.rel (0) target = $region29
    $region28: #{tpu_custom_call.1} parent=1 // pred_region
      %610 = dma.done [#allocation4], 2048
    $region29: #{tpu_custom_call.1} parent=1 // pred_fallthru
      _
    %611 = vsyncpa [#allocation3], 1
    %612 = vsyncpa [#allocation6], 1
    %613 = vsyncpa [#allocation4], 1

</llo_original>
